<compile_context>
chip_gen: v6e
topology: v6e:2x2x1
jax: 0.10.0
libtpu: 0.0.40
codegen_flags: <defaults>
</compile_context>

<pallas_src>
import functools

import jax
import jax.numpy as jnp
from jax.experimental import pallas as pl
from jax.experimental.pallas import tpu as pltpu


def _round_up(x, m):
    return (x + m - 1) // m * m


def _mmd_kernel(z_ref, out_ref, gram_ref, *, n_valid, dim, gamma):
    k = pl.program_id(0)

    @pl.when(k == 0)
    def _init():
        gram_ref[...] = jnp.zeros_like(gram_ref)

    # One MXU push per D-tile: partial Gram of the stacked [src; tgt] rows.
    z = z_ref[...]
    gram_ref[...] += jax.lax.dot_general(
        z, z,
        dimension_numbers=(((1,), (1,)), ((), ())),   # z @ z.T
        preferred_element_type=jnp.float32,
    )

    @pl.when(k == pl.num_programs(0) - 1)
    def _finalize():
        g = gram_ref[...]                              # (r, r) f32
        r = g.shape[0]
        row = jax.lax.broadcasted_iota(jnp.int32, (r, r), 0)
        col = jax.lax.broadcasted_iota(jnp.int32, (r, r), 1)

        # Row squared norms come for free from the Gram diagonal.
        eye = (row == col).astype(jnp.float32)
        nrm_i = jnp.sum(g * eye, axis=1, keepdims=True)   # (r, 1): ||z_i||^2
        nrm_j = jnp.sum(g * eye, axis=0, keepdims=True)   # (1, r): ||z_j||^2

        # ||z_i - z_j||^2 via the Gram identity, clamped against cancellation.
        d2 = jnp.maximum(nrm_i + nrm_j - 2.0 * g, 0.0)

        # gaussian_kernel: exp(-gamma * mean_d((x-y)^2) / dim) = exp(-gamma*d2/dim^2)
        kmat = jnp.exp(jnp.float32(-gamma / (dim * dim)) * d2)

        # +1 for (reference-padded) source rows, -1 for target rows,
        # 0 for TPU alignment-padding rows.
        def sgn(idx):
            is_src = (idx < n_valid).astype(jnp.float32)
            is_tgt = ((idx >= n_valid) & (idx < 2 * n_valid)).astype(jnp.float32)
            return is_src - is_tgt

        w = sgn(row) * sgn(col)                        # s_i * s_j
        out_ref[0] = jnp.sum(w * kmat) * jnp.float32(1.0 / (n_valid * n_valid))


def domain_discrepancy_loss(source_features, target_features, *, gamma=1.0,
                            tile_d=None, block_budget_bytes=2 << 20):
    """MMD loss matching DomainDiscrepancyLoss.forward (rbf kernel)."""
    src = source_features.reshape(source_features.shape[0], -1)
    tgt = target_features.reshape(target_features.shape[0], -1)
    assert src.shape[1] == tgt.shape[1], "feature dims must match"
    assert src.dtype == tgt.dtype, "feature dtypes must match"
    dim = src.shape[1]
    dtype = src.dtype
    itemsize = jnp.dtype(dtype).itemsize

    # Reference semantics: zero-pad the smaller batch so both have
    # n = max(n_src, n_tgt) rows; those rows DO count in the means.
    n = max(src.shape[0], tgt.shape[0])
    src = jnp.pad(src, ((0, n - src.shape[0]), (0, 0)))
    tgt = jnp.pad(tgt, ((0, n - tgt.shape[0]), (0, 0)))

    # Stack into one operand so every D-tile needs a single Gram matmul.
    z = jnp.concatenate([src, tgt], axis=0)            # (2n, D), native dtype

    # TPU alignment padding (masked out inside the kernel via the sign weights).
    row_mult = 8 if itemsize >= 4 else (16 if itemsize == 2 else 32)
    r_pad = _round_up(2 * n, row_mult)

    # Lane-dense D tiling sized from a per-block VMEM budget.
    d_pad = _round_up(dim, 128)
    if tile_d is None:
        tile_d = max(128, (block_budget_bytes // (r_pad * itemsize)) // 128 * 128)
    td = min(_round_up(tile_d, 128), d_pad)
    d_pad = _round_up(d_pad, td)

    z = jnp.pad(z, ((0, r_pad - 2 * n), (0, d_pad - dim)))

    acc_bytes = r_pad * r_pad * 4
    block_bytes = r_pad * td * itemsize
    vmem_limit = int(min(acc_bytes + 2 * block_bytes + (4 << 20), 128 << 20))
    # TODO(synk): for very large batches (2n in the multi-thousand range) the
    # resident (2n)^2 f32 Gram accumulator exceeds v7x's 64 MiB VMEM; switch to
    # a 2-D (tm, tn) output tiling with parallel (i, j) grid axes there.

    kernel = functools.partial(_mmd_kernel, n_valid=n, dim=dim,
                               gamma=float(gamma))
    out = pl.pallas_call(
        kernel,
        out_shape=jax.ShapeDtypeStruct((1,), jnp.float32),
        grid_spec=pltpu.PrefetchScalarGridSpec(
            num_scalar_prefetch=0,
            grid=(d_pad // td,),                        # reduction over feature tiles
            in_specs=[pl.BlockSpec((r_pad, td), lambda k: (0, k))],
            out_specs=pl.BlockSpec(memory_space=pltpu.MemorySpace.SMEM),
            scratch_shapes=[
                pltpu.VMEM((r_pad, r_pad), jnp.float32),   # Gram accumulator
            ],
        ),
        compiler_params=pltpu.CompilerParams(
            dimension_semantics=("arbitrary",),
            vmem_limit_bytes=vmem_limit),
    )(z)
    return out[0]


def _mmd_reference(source, target, gamma=1.0):
    """Pure-JAX transliteration of the PyTorch module (for verification)."""
    src = source.reshape(source.shape[0], -1).astype(jnp.float32)
    tgt = target.reshape(target.shape[0], -1).astype(jnp.float32)
    n = max(src.shape[0], tgt.shape[0])
    src = jnp.pad(src, ((0, n - src.shape[0]), (0, 0)))
    tgt = jnp.pad(tgt, ((0, n - tgt.shape[0]), (0, 0)))
    dim = src.shape[1]

    def gk(x, y):
        d2 = jnp.mean((x[:, None, :] - y[None, :, :]) ** 2, axis=2) / dim
        return jnp.exp(-gamma * d2)

    return (jnp.mean(gk(src, src)) + jnp.mean(gk(tgt, tgt))
            - 2.0 * jnp.mean(gk(src, tgt)))


if __name__ == "__main__":
    key = jax.random.PRNGKey(0)
    k1, k2 = jax.random.split(key)

    # source: 8 samples, target: 6 samples (unequal -> exercises the F.pad path),
    # feature maps (4, 8, 8) -> flattened feature dim D = 256.  Target gets a
    # mean shift so the two domains genuinely differ (non-trivial MMD).
    source = 2.0 * jax.random.normal(k1, (8, 4, 8, 8), dtype=jnp.float32)
    target = 2.0 * jax.random.normal(k2, (6, 4, 8, 8), dtype=jnp.float32) + 1.5

    # tile_d=128 -> a 2-step reduction grid, exercising the accumulate path.
    mmd = domain_discrepancy_loss(source, target, gamma=1.0, tile_d=128)
    jax.block_until_ready(mmd)

    ref = _mmd_reference(source, target, gamma=1.0)
    # DEFAULT-precision MXU (bf16 operand rounding, f32 accumulate) vs. the
    # exact f32 VPU reference -> modest tolerance.
    assert jnp.allclose(mmd, ref, rtol=2e-2, atol=2e-4), (float(mmd), float(ref))

    print("KERNEL_OK")
</pallas_src>

<mosaic_0001>
module attributes {stable_mosaic.version = 11 : i64} {
  func.func @_mmd_kernel(%arg0: i32, %arg1: memref<16x128xf32, #tpu.memory_space<vmem>>, %arg2: memref<1xf32, #tpu.memory_space<smem>>, %arg3: memref<16x16xf32, #tpu.memory_space<vmem>>) attributes {dimension_semantics = [#tpu.dimension_semantics<arbitrary>], iteration_bounds = array<i64: 2>, scalar_prefetch = 0 : i64, scratch_operands = 1 : i64, tpu.core_type = #tpu.core_type<tc>, window_params = [{transform_indices = @transform_0, window_bounds = array<i64: 16, 128>}, {transform_indices = @transform_1, window_bounds = array<i64: 1>}]} {
    %c0_i32 = arith.constant 0 : i32
    %0 = arith.cmpi eq, %arg0, %c0_i32 : i32
    %1 = arith.extui %0 : i1 to i32
    %c0_i32_0 = arith.constant 0 : i32
    %2 = arith.cmpi ne, %1, %c0_i32_0 : i32
    scf.if %2 {
      %cst_7 = arith.constant 0.000000e+00 : f32
      %11 = vector.broadcast %cst_7 : f32 to vector<16x16xf32>
      %c0_8 = arith.constant 0 : index
      %c0_9 = arith.constant 0 : index
      %12 = vector.load %arg3[%c0_8, %c0_9] : memref<16x16xf32, #tpu.memory_space<vmem>>, vector<16x16xf32>
      tpu.vector_store %arg3[%c0_8, %c0_9], %11 {strides = array<i32>} : memref<16x16xf32, #tpu.memory_space<vmem>>, vector<16x16xf32>,
    } else {
    }
    %c0 = arith.constant 0 : index
    %c0_1 = arith.constant 0 : index
    %3 = vector.load %arg1[%c0, %c0_1] : memref<16x128xf32, #tpu.memory_space<vmem>>, vector<16x128xf32>
    %c0_2 = arith.constant 0 : index
    %c0_3 = arith.constant 0 : index
    %4 = vector.load %arg3[%c0_2, %c0_3] : memref<16x16xf32, #tpu.memory_space<vmem>>, vector<16x16xf32>
    %cst = arith.constant dense<0.000000e+00> : vector<16x16xf32>
    %5 = tpu.matmul %3, %3, %cst {dimension_numbers = #tpu.dot_dimension_numbers<[1], [1], [0], [0], [0, 0, 1, 0], [], []>} : vector<16x128xf32>, vector<16x128xf32>, vector<16x16xf32> -> vector<16x16xf32>
    %6 = arith.addf %4, %5 : vector<16x16xf32>
    %c0_4 = arith.constant 0 : index
    %c0_5 = arith.constant 0 : index
    %7 = vector.load %arg3[%c0_4, %c0_5] : memref<16x16xf32, #tpu.memory_space<vmem>>, vector<16x16xf32>
    tpu.vector_store %arg3[%c0_4, %c0_5], %6 {strides = array<i32>} : memref<16x16xf32, #tpu.memory_space<vmem>>, vector<16x16xf32>,
    %c1_i32 = arith.constant 1 : i32
    %8 = arith.cmpi eq, %arg0, %c1_i32 : i32
    %9 = arith.extui %8 : i1 to i32
    %c0_i32_6 = arith.constant 0 : i32
    %10 = arith.cmpi ne, %9, %c0_i32_6 : i32
    scf.if %10 {
      %c0_7 = arith.constant 0 : index
      %c0_8 = arith.constant 0 : index
      %11 = vector.load %arg3[%c0_7, %c0_8] : memref<16x16xf32, #tpu.memory_space<vmem>>, vector<16x16xf32>
      %12 = tpu.iota {dimensions = array<i32: 0>} : vector<16x16xi32>
      %13 = tpu.iota {dimensions = array<i32: 1>} : vector<16x16xi32>
      %14 = arith.cmpi eq, %12, %13 : vector<16x16xi32>
      %15 = arith.extui %14 : vector<16x16xi1> to vector<16x16xi32>
      %16 = arith.sitofp %15 : vector<16x16xi32> to vector<16x16xf32>
      %17 = arith.mulf %11, %16 : vector<16x16xf32>
      %cst_9 = arith.constant dense<0.000000e+00> : vector<16xf32>
      %18 = vector.multi_reduction <add>, %17, %cst_9 [1] : vector<16x16xf32> to vector<16xf32>
      %19 = vector.shape_cast %18 : vector<16xf32> to vector<16x1xf32>
      %20 = arith.mulf %11, %16 : vector<16x16xf32>
      %cst_10 = arith.constant dense<0.000000e+00> : vector<16xf32>
      %21 = vector.multi_reduction <add>, %20, %cst_10 [0] : vector<16x16xf32> to vector<16xf32>
      %22 = vector.shape_cast %21 : vector<16xf32> to vector<1x16xf32>
      %23 = vector.broadcast %19 : vector<16x1xf32> to vector<16x16xf32>
      %24 = vector.broadcast %22 : vector<1x16xf32> to vector<16x16xf32>
      %25 = arith.addf %23, %24 : vector<16x16xf32>
      %cst_11 = arith.constant 2.000000e+00 : f32
      %26 = vector.broadcast %cst_11 : f32 to vector<16x16xf32>
      %27 = arith.mulf %26, %11 : vector<16x16xf32>
      %28 = arith.subf %25, %27 : vector<16x16xf32>
      %cst_12 = arith.constant 0.000000e+00 : f32
      %29 = vector.broadcast %cst_12 : f32 to vector<16x16xf32>
      %30 = arith.maximumf %28, %29 : vector<16x16xf32>
      %cst_13 = arith.constant -1.52587891E-5 : f32
      %31 = vector.broadcast %cst_13 : f32 to vector<16x16xf32>
      %32 = arith.mulf %31, %30 : vector<16x16xf32>
      %33 = math.exp %32 : vector<16x16xf32>
      %c8_i32 = arith.constant 8 : i32
      %34 = vector.broadcast %c8_i32 : i32 to vector<16x16xi32>
      %35 = arith.cmpi slt, %12, %34 : vector<16x16xi32>
      %36 = arith.extui %35 : vector<16x16xi1> to vector<16x16xi32>
      %37 = arith.sitofp %36 : vector<16x16xi32> to vector<16x16xf32>
      %c8_i32_14 = arith.constant 8 : i32
      %38 = vector.broadcast %c8_i32_14 : i32 to vector<16x16xi32>
      %39 = arith.cmpi sge, %12, %38 : vector<16x16xi32>
      %c16_i32 = arith.constant 16 : i32
      %40 = vector.broadcast %c16_i32 : i32 to vector<16x16xi32>
      %41 = arith.cmpi slt, %12, %40 : vector<16x16xi32>
      %42 = arith.andi %39, %41 : vector<16x16xi1>
      %43 = arith.extui %42 : vector<16x16xi1> to vector<16x16xi32>
      %44 = arith.sitofp %43 : vector<16x16xi32> to vector<16x16xf32>
      %45 = arith.subf %37, %44 : vector<16x16xf32>
      %c8_i32_15 = arith.constant 8 : i32
      %46 = vector.broadcast %c8_i32_15 : i32 to vector<16x16xi32>
      %47 = arith.cmpi slt, %13, %46 : vector<16x16xi32>
      %48 = arith.extui %47 : vector<16x16xi1> to vector<16x16xi32>
      %49 = arith.sitofp %48 : vector<16x16xi32> to vector<16x16xf32>
      %c8_i32_16 = arith.constant 8 : i32
      %50 = vector.broadcast %c8_i32_16 : i32 to vector<16x16xi32>
      %51 = arith.cmpi sge, %13, %50 : vector<16x16xi32>
      %c16_i32_17 = arith.constant 16 : i32
      %52 = vector.broadcast %c16_i32_17 : i32 to vector<16x16xi32>
      %53 = arith.cmpi slt, %13, %52 : vector<16x16xi32>
      %54 = arith.andi %51, %53 : vector<16x16xi1>
      %55 = arith.extui %54 : vector<16x16xi1> to vector<16x16xi32>
      %56 = arith.sitofp %55 : vector<16x16xi32> to vector<16x16xf32>
      %57 = arith.subf %49, %56 : vector<16x16xf32>
      %58 = arith.mulf %45, %57 : vector<16x16xf32>
      %59 = arith.mulf %58, %33 : vector<16x16xf32>
      %60 = vector.shape_cast %59 : vector<16x16xf32> to vector<1x16x16xf32>
      %cst_18 = arith.constant dense<0.000000e+00> : vector<1xf32>
      %61 = vector.multi_reduction <add>, %60, %cst_18 [1, 2] : vector<1x16x16xf32> to vector<1xf32>
      %62 = vector.shape_cast %61 : vector<1xf32> to vector<1x1x1xf32>
      %63 = vector.extract %62[0, 0, 0] : f32 from vector<1x1x1xf32>
      %cst_19 = arith.constant 1.562500e-02 : f32
      %64 = arith.mulf %63, %cst_19 : f32
      %c0_20 = arith.constant 0 : index
      %65 = memref.load %arg2[%c0_20] : memref<1xf32, #tpu.memory_space<smem>>
      memref.store %64, %arg2[%c0_20] : memref<1xf32, #tpu.memory_space<smem>>
    } else {
    }
    return
  }
  func.func @transform_0(%arg0: i32) -> (i32, i32) {
    %c0_i32 = arith.constant 0 : i32
    %c0_i32_0 = arith.constant 0 : i32
    return %c0_i32, %arg0 : i32, i32
  }
  func.func @transform_1(%arg0: i32) -> i32 {
    %c0_i32 = arith.constant 0 : i32
    %c0_i32_0 = arith.constant 0 : i32
    return %c0_i32 : i32
  }
}

</mosaic_0001>

<llo_original>
// kernel: tpu_custom_call.1
$region0: #{tpu_custom_call.1}
  #allocation0 [shape = 'u32[]', space=smem, size = 0x4, offset = 0x4, fixed_abs, tag = 'smem constant byte address 0x4 - core index']
  #allocation1 [shape = 'u32[144,128]{1,0:T(1,128)}', space=vmem, size = 0x12000, scoped, tag = 'internal scratch']
  #allocation2 [shape = 'f32[16,16]{1,0:T(8,128)}', space=vmem, size = 0x2000, scoped, tag = 'scratch operand']
  %s0 = inlined_call_operand.hbm [shape: f32[16,256], index: 0, kind: input, shape index: {}]
  %s1 = inlined_call_operand.hbm [shape: f32[1], index: 1, kind: output, shape index: {}]
  %s2 = sld [smem:[#allocation0]]
  $region49: #{tpu_custom_call.1} parent=0
    _
  %s4 = ssub.s32 1, %s2
  %s5 = scalar_select 0, %s4, %s2
  $region1: #{tpu_custom_call.1} parent=0
    #allocation3 [shape = 'u8[16384]{0}', space=vmem, size = 0x4000, scoped, tag = 'input window, operand 0']
    #allocation4 [shape = 's32[2]{0}', space=sflag, size = 0x8, scoped, tag = 'scoped memory for tpu_custom_call.1']
    #allocation5 [shape = 's32[2]{0}', space=sflag, size = 0x8, scoped, tag = 'scoped memory for tpu_custom_call.1']
    #allocation6 [shape = 'u8[512]{0}', space=smem, size = 0x200, scoped, tag = 'output window, operand 0, single buffered']
    %6 = vsyncpa [#allocation4], 0
    %s7 = scalar_lea.sflag [#allocation4], 1
    %8 = vsyncpa %s7, 0
    %9 = vsyncpa [#allocation5], 0
    loop: start=0, step=1, limit=4
    $region2: #{tpu_custom_call.1} parent=1 // loop_pre_header
      _
    $region3: #{tpu_custom_call.1} parent=1 // loop_header
      %s11 = sphi 0, %s15
      %p12 = scmp.ge.s32.totalorder %s11, 4
      %s21 = sphi 0, %s23
      %s24 = sphi 0, %s21
      %s25 = sphi 0, %s24
      %s41 = sphi 0, %s25
      %s45 = sphi 0, %s45
      %s47 = sphi 0, %s45
      %s48 = sphi 0, %s47
      %s62 = sphi 0, %s48
    $region4: #{tpu_custom_call.1} parent=1 // loop_header_branch
      %14 = sbr.rel (%p12) target = $region8
    $region5: #{tpu_custom_call.1} parent=1 // loop_body
      %s16 = ssub.s32 %s11, 1
      %s17 = ssub.s32 %s11, 2
      %s18 = sadd.s32 %s11, 1
      %s19 = ssub.s32 %s11, %s18
      %p20 = scmp.eq.s32.totalorder %s19, 0
      %s22 = sadd.s32 %s21, 1
      %s23 = scalar_select %p20, %s21, %s22
      %p26 = pneg %p20
      %p27 = scmp.eq.s32.totalorder %s11, 1
      %p28 = por %p26, %p27
      %p29 = scmp.ne.s32.totalorder %s21, %s24
      %p30 = scmp.eq.s32.totalorder %s11, 0
      %p31 = por %p29, %p30
      %p32 = scmp.ne.s32.totalorder %s21, %s24
      %p33 = scmp.eq.s32.totalorder %s16, 1
      %p34 = por %p32, %p33
      %p35 = scmp.ne.s32.totalorder %s24, %s25
      %p36 = scmp.eq.s32.totalorder %s16, 0
      %p37 = por %p35, %p36
      %p38 = scmp.ne.s32.totalorder %s24, %s25
      %p39 = scmp.eq.s32.totalorder %s17, 1
      %p40 = por %p38, %p39
      %p42 = scmp.ne.s32.totalorder %s25, %s41
      %p43 = scmp.eq.s32.totalorder %s17, 0
      %p44 = por %p42, %p43
      %s46 = sadd.s32 %s45, 1
      %p49 = scmp.eq.s32.totalorder %s11, 1
      %p50 = scmp.ne.s32.totalorder %s45, %s47
      %p51 = scmp.eq.s32.totalorder %s11, 0
      %p52 = por %p50, %p51
      %p53 = scmp.ne.s32.totalorder %s45, %s47
      %p54 = scmp.eq.s32.totalorder %s16, 1
      %p55 = por %p53, %p54
      %p56 = scmp.ne.s32.totalorder %s47, %s48
      %p57 = scmp.eq.s32.totalorder %s16, 0
      %p58 = por %p56, %p57
      %p59 = scmp.ne.s32.totalorder %s47, %s48
      %p60 = scmp.eq.s32.totalorder %s17, 1
      %p61 = por %p59, %p60
      %p63 = scmp.ne.s32.totalorder %s48, %s62
      %p64 = scmp.eq.s32.totalorder %s17, 0
      %p65 = por %p63, %p64
      %p66 = scmp.le.s32.totalorder 1, %s11
      %p67 = scmp.lt.s32.totalorder %s11, 3
      %p68 = pnand %p66, %p67
      %p69 = pneg %p68
      // Predicated region
      $region9: #{tpu_custom_call.1} parent=5 // pred_check
        _
      $region10: #{tpu_custom_call.1} parent=5 // pred_check_branch
        %71 = sbr.rel (%p68) target = $region12
      $region11: #{tpu_custom_call.1} parent=5 // pred_region
        %s72 = ssub.s32 %s11, 1
      $region12: #{tpu_custom_call.1} parent=5 // pred_fallthru
        _
      %p73 = scmp.lt.s32.totalorder %s11, 2
      // Predicated region
      $region13: #{tpu_custom_call.1} parent=5 // pred_check
        %p74 = pneg %p73
      $region14: #{tpu_custom_call.1} parent=5 // pred_check_branch
        %76 = sbr.rel (%p74) target = $region16
      $region15: #{tpu_custom_call.1} parent=5 // pred_region
        // Predicated region
        $region17: #{tpu_custom_call.1} parent=15 // pred_check
          %p77 = pneg %p31
        $region18: #{tpu_custom_call.1} parent=15 // pred_check_branch
          %79 = sbr.rel (%p77) target = $region20
        $region19: #{tpu_custom_call.1} parent=15 // pred_region
          %s80 = sand.u32 %s21, 1
          %s81 = scalar_lea.sflag [#allocation4], %s80
          %s82 = sand.u32 %s21, 1
          %s83 = smul.addr %s82, 16
          %s84 = scalar_lea.vmem [#allocation3], %s83
          %s86 = ssub.s32 256, 256
          %87 = vsyncadd %s81, %s86
          %s88 = smul.addr %s11, 128
          %s89 = scalar_lea.hbm %s0, %s88
          %s90 = sshll.u32 %s84, 4
          %s91 = int_to_ptr.vmem [resolvable:$true] %s90
          %96 = dma.hbm_to_vmem [thread:$0]  %s89, 256, %s91, %s81, 256, 128, 8
        $region20: #{tpu_custom_call.1} parent=15 // pred_fallthru
          _
      $region16: #{tpu_custom_call.1} parent=5 // pred_fallthru
        _
      %p97 = scmp.le.s32.totalorder 1, %s11
      %p98 = scmp.lt.s32.totalorder %s11, 3
      %p99 = pnand %p97, %p98
      %p100 = pneg %p99
      // Predicated region
      $region21: #{tpu_custom_call.1} parent=5 // pred_check
        _
      $region22: #{tpu_custom_call.1} parent=5 // pred_check_branch
        %102 = sbr.rel (%p99) target = $region24
      $region23: #{tpu_custom_call.1} parent=5 // pred_region
        %s103 = ssub.s32 %s11, 1
        %s104 = sand.u32 %s24, 1
        %s105 = scalar_lea.sflag [#allocation4], %s104
        %s106 = sand.u32 %s24, 1
        %s107 = smul.addr %s106, 16
        %s108 = scalar_lea.vmem [#allocation3], %s107
        // Predicated region
        $region25: #{tpu_custom_call.1} parent=23 // pred_check
          %p109 = pneg %p37
        $region26: #{tpu_custom_call.1} parent=23 // pred_check_branch
          %111 = sbr.rel (%p109) target = $region28
        $region27: #{tpu_custom_call.1} parent=23 // pred_region
          %112 = dma.done %s105, 256
        $region28: #{tpu_custom_call.1} parent=23 // pred_fallthru
          _
        %s113 = sand.u32 %s24, 1
        %s114 = scalar_lea.sflag [#allocation4], %s113
        %s115 = sand.u32 %s24, 1
        %s116 = smul.addr %s115, 16
        %s117 = scalar_lea.vmem [#allocation3], %s116
        %p118 = pneg %p37
        %p119 = pneg %p34
        %p120 = pneg %p58
        %p121 = pneg %p55
        %p122 = scmp.eq.s32.totalorder %s16, 0
        // Predicated region
        $region29: #{tpu_custom_call.1} parent=23 // pred_check
          %p123 = pneg %p122
        $region30: #{tpu_custom_call.1} parent=23 // pred_check_branch
          %125 = sbr.rel (%p123) target = $region32
        $region31: #{tpu_custom_call.1} parent=23 // pred_region
          %vm126 = vcmask 130048
          %127 = vst.msk [vmem:[#allocation2] sm:$0xff] %vm126, 0.0
          %128 = vst.msk [vmem:[#allocation2 + $0x8] sm:$0xff] %vm126, 0.0
        $region32: #{tpu_custom_call.1} parent=23 // pred_fallthru
          _
        %v129 = vld [vmem:[%s108] sm:$0xff]
        %v130 = vld [vmem:[%s108 + $0x8] sm:$0xff]
        %v131 = vld [vmem:[#allocation2] sm:$0xff]
        %v132 = vld [vmem:[#allocation2 + $0x8] sm:$0xff]
        %133 = vmatprep.subr.mxu0 0.0
        %134 = vmatpush1.xpose.msra.mxu0 0.0
        %135 = vmatprep.subr.mxu0 0.0
        %136 = vmatpush1.xpose.msra.mxu0 0.0
        %137 = vmatprep.subr.mxu0 0.0
        %138 = vmatpush1.xpose.msra.mxu0 0.0
        %139 = vmatprep.subr.mxu0 0.0
        %140 = vmatpush1.xpose.msra.mxu0 0.0
        %141 = vmatprep.subr.mxu0 0.0
        %142 = vmatpush1.xpose.msra.mxu0 0.0
        %143 = vmatprep.subr.mxu0 0.0
        %144 = vmatpush1.xpose.msra.mxu0 0.0
        %145 = vmatprep.subr.mxu0 0.0
        %146 = vmatpush1.xpose.msra.mxu0 0.0
        %147 = vmatprep.subr.mxu0 0.0
        %148 = vmatpush1.xpose.msra.mxu0 0.0
        %149 = vmatprep.subr.mxu0 0.0
        %150 = vmatpush1.xpose.msra.mxu0 0.0
        %151 = vmatprep.subr.mxu0 0.0
        %152 = vmatpush1.xpose.msra.mxu0 0.0
        %153 = vmatprep.subr.mxu0 0.0
        %154 = vmatpush1.xpose.msra.mxu0 0.0
        %155 = vmatprep.subr.mxu0 0.0
        %156 = vmatpush1.xpose.msra.mxu0 0.0
        %157 = vmatprep.subr.mxu0 0.0
        %158 = vmatpush1.xpose.msra.mxu0 0.0
        %159 = vmatprep.subr.mxu0 0.0
        %160 = vmatpush1.xpose.msra.mxu0 0.0
        %161 = vmatprep.subr.mxu0 0.0
        %162 = vmatpush1.xpose.msra.mxu0 %v130
        %163 = vmatprep.subr.mxu0 0.0
        %164 = vmatpush1.xpose.msra.mxu0 %v129
        %165 = vmatprep.subr.mxu0 0.0
        %166 = vmatpush2.xpose.msra.mxu0 0.0
        %167 = vmatprep.subr.mxu0 0.0
        %168 = vmatpush2.xpose.msra.mxu0 0.0
        %169 = vmatprep.subr.mxu0 0.0
        %170 = vmatpush2.xpose.msra.mxu0 0.0
        %171 = vmatprep.subr.mxu0 0.0
        %172 = vmatpush2.xpose.msra.mxu0 0.0
        %173 = vmatprep.subr.mxu0 0.0
        %174 = vmatpush2.xpose.msra.mxu0 0.0
        %175 = vmatprep.subr.mxu0 0.0
        %176 = vmatpush2.xpose.msra.mxu0 0.0
        %177 = vmatprep.subr.mxu0 0.0
        %178 = vmatpush2.xpose.msra.mxu0 0.0
        %179 = vmatprep.subr.mxu0 0.0
        %180 = vmatpush2.xpose.msra.mxu0 0.0
        %181 = vmatprep.subr.mxu0 0.0
        %182 = vmatpush2.xpose.msra.mxu0 0.0
        %183 = vmatprep.subr.mxu0 0.0
        %184 = vmatpush2.xpose.msra.mxu0 0.0
        %185 = vmatprep.subr.mxu0 0.0
        %186 = vmatpush2.xpose.msra.mxu0 0.0
        %187 = vmatprep.subr.mxu0 0.0
        %188 = vmatpush2.xpose.msra.mxu0 0.0
        %189 = vmatprep.subr.mxu0 0.0
        %190 = vmatpush2.xpose.msra.mxu0 0.0
        %191 = vmatprep.subr.mxu0 0.0
        %192 = vmatpush2.xpose.msra.mxu0 0.0
        %193 = vmatprep.subr.mxu0 0.0
        %194 = vmatpush2.xpose.msra.mxu0 0.0
        %195 = vmatprep.subr.mxu0 0.0
        %196 = vmatpush2.xpose.msra.mxu0 0.0
        %197 = vmatprep.mubr.f32.mxu0 0.0
        %198 = vmatmul.mubr.f32.gmra.mxu0 %v129
        %v199 = vpop.f32.mrf.mxu0
        %v200 = vadd.f32 0.0, %v199
        %v201 = vpop.f32.mrf.mxu0
        %202 = vmatprep.mubr.f32.mxu0 0.0
        %203 = vmatmul.mubr.f32.gmra.mxu0 %v130
        %v204 = vpop.f32.mrf.mxu0
        %v205 = vadd.f32 0.0, %v204
        %v206 = vpop.f32.mrf.mxu0
        %207 = vdwg.mxu0
        %v208 = vadd.f32 %v131, %v200
        %v209 = vadd.f32 %v132, %v205
        %vm210 = vcmask 130048
        %211 = vst.msk [vmem:[#allocation2] sm:$0xff] %vm210, %v208
        %212 = vst.msk [vmem:[#allocation2 + $0x8] sm:$0xff] %vm210, %v209
        %p213 = scmp.eq.s32.totalorder %s16, 1
        // Predicated region
        $region33: #{tpu_custom_call.1} parent=23 // pred_check
          %p214 = pneg %p213
        $region34: #{tpu_custom_call.1} parent=23 // pred_check_branch
          %216 = sbr.rel (%p214) target = $region36
        $region35: #{tpu_custom_call.1} parent=23 // pred_region
          %v217 = vld [vmem:[#allocation2] sm:$0xff]
          %v218 = vld [vmem:[#allocation2 + $0x8] sm:$0xff]
          %v219 = vlaneseq
          %v220 = vshrl.u32 %v219, 7
          %v221 = vadd.s32 %v220, 8
          %v222 = vlaneseq
          %v223 = vand.u32 %v222, 127
          %vm224 = vcmp.eq.s32.totalorder %v220, %v223
          %vm225 = vcmp.eq.s32.totalorder %v221, %v223
          %v226 = vsel %vm224, 1, 0
          %v227 = vsel %vm225, 1, 0
          %v228 = vcvt.s32.f32 %v226
          %v229 = vcvt.s32.f32 %v227
          %v230 = vmul.f32 %v217, %v228
          %v231 = vmul.f32 %v218, %v229
          %v232 = vsel %vm210, %v230, 0.0
          %233 = vadd.xlane.f32.xlu0 %v232
          %v234 = vpop.xlane.xlu0 %233
          %v235 = vsel %vm210, %v231, 0.0
          %236 = vadd.xlane.f32.xlu0 %v235
          %v237 = vpop.xlane.xlu0 %236
          %v238 = vadd.f32 %v232, %v235
          %v239 = vrot.slane %v238, 4
          %v240 = vadd.f32 %v238, %v239
          %v241 = vrot.slane %v240, 2
          %v242 = vadd.f32 %v240, %v241
          %v243 = vrot.slane %v242, 1
          %v244 = vadd.f32 %v242, %v243
          %v245 = vadd.f32 %v234, %v244
          %v246 = vadd.f32 %v237, %v244
          %v247 = vmul.f32 %v217, 2.0
          %v248 = vmul.f32 %v218, 2.0
          %v249 = vsub.f32 %v245, %v247
          %v250 = vsub.f32 %v246, %v248
          %v251 = vmax.f32 %v249, 0.0
          %v252 = vmax.f32 %v250, 0.0
          %v253 = vmul.f32 %v251, -1.5258789e-05
          %v254 = vmul.f32 %v252, -1.5258789e-05
          %v255 = vmul.f32 %v253, 1.442695
          %v256 = vpow.pop %v255
          %v257 = vmul.f32 %v254, 1.442695
          %v258 = vpow.pop %v257
          %vm259 = vcmp.lt.s32.totalorder %v220, 8
          %vm260 = vcmp.lt.s32.totalorder %v221, 8
          %v261 = vsel %vm259, 1, 0
          %v262 = vsel %vm260, 1, 0
          %v263 = vcvt.s32.f32 %v261
          %v264 = vcvt.s32.f32 %v262
          %vm265 = vcmp.ge.s32.totalorder %v220, 8
          %vm266 = vcmp.ge.s32.totalorder %v221, 8
          %vm267 = vcmp.lt.s32.totalorder %v220, 16
          %vm268 = vcmp.lt.s32.totalorder %v221, 16
          %vm269 = vmand %vm265, %vm267
          %vm270 = vmand %vm266, %vm268
          %v271 = vsel %vm269, 1, 0
          %v272 = vsel %vm270, 1, 0
          %v273 = vcvt.s32.f32 %v271
          %v274 = vcvt.s32.f32 %v272
          %v275 = vsub.f32 %v263, %v273
          %v276 = vsub.f32 %v264, %v274
          %vm277 = vcmp.lt.s32.totalorder %v223, 8
          %v278 = vsel %vm277, 1, 0
          %v279 = vcvt.s32.f32 %v278
          %vm280 = vcmp.ge.s32.totalorder %v223, 8
          %vm281 = vcmp.lt.s32.totalorder %v223, 16
          %vm282 = vmand %vm280, %vm281
          %v283 = vsel %vm282, 1, 0
          %v284 = vcvt.s32.f32 %v283
          %v285 = vsub.f32 %v279, %v284
          %v286 = vmul.f32 %v275, %v285
          %v287 = vmul.f32 %v276, %v285
          %v288 = vmul.f32 %v286, %v256
          %v289 = vmul.f32 %v287, %v258
          %v290 = vsel %vm210, %v288, 0.0
          %v291 = vsel %vm210, %v289, 0.0
          %v292 = vadd.f32 %v290, %v291
          %293 = vadd.xlane.f32.xlu0 %v292
          %v294 = vpop.xlane.xlu0 %293
          %v295 = vrot.slane %v294, 4
          %v296 = vadd.f32 %v294, %v295
          %v297 = vrot.slane %v296, 2
          %v298 = vadd.f32 %v296, %v297
          %v299 = vrot.slane %v298, 1
          %v300 = vadd.f32 %v298, %v299
          %s301 = vtos %v300
          %s302 = smul.f32 %s301, 0.015625
          %s303 = scalar_lea.smem [#allocation6], 0
          %304 = sst [smem:[%s303]] %s302
        $region36: #{tpu_custom_call.1} parent=23 // pred_fallthru
          _
        // Predicated region
        $region37: #{tpu_custom_call.1} parent=23 // pred_check
          %p305 = pneg %p55
        $region38: #{tpu_custom_call.1} parent=23 // pred_check_branch
          %307 = sbr.rel (%p305) target = $region40
        $region39: #{tpu_custom_call.1} parent=23 // pred_region
          %s309 = ssub.s32 16, 16
          %310 = vsyncadd [#allocation5], %s309
          %313 = dma.smem_to_hbm [#allocation6], 16, %s1, [#allocation5]
        $region40: #{tpu_custom_call.1} parent=23 // pred_fallthru
          _
        // Predicated region
        $region41: #{tpu_custom_call.1} parent=23 // pred_check
          %p314 = pneg %p55
        $region42: #{tpu_custom_call.1} parent=23 // pred_check_branch
          %316 = sbr.rel (%p314) target = $region44
        $region43: #{tpu_custom_call.1} parent=23 // pred_region
          %317 = dma.done [#allocation5], 16
        $region44: #{tpu_custom_call.1} parent=23 // pred_fallthru
          _
        %318 = sfence
      $region24: #{tpu_custom_call.1} parent=5 // pred_fallthru
        _
      %p319 = scmp.le.s32.totalorder 2, %s11
      // Predicated region
      $region45: #{tpu_custom_call.1} parent=5 // pred_check
        %p320 = pneg %p319
      $region46: #{tpu_custom_call.1} parent=5 // pred_check_branch
        %322 = sbr.rel (%p320) target = $region48
      $region47: #{tpu_custom_call.1} parent=5 // pred_region
        %s323 = ssub.s32 %s11, 2
      $region48: #{tpu_custom_call.1} parent=5 // pred_fallthru
        _
    $region6: #{tpu_custom_call.1} parent=1 // loop_footer
      %s15 = sadd.s32 1, %s11
    $region7: #{tpu_custom_call.1} parent=1 // loop_footer_branch
      %10 = sbr.rel target = $region3
    $region8: #{tpu_custom_call.1} parent=1 // loop_exit
      _
    %324 = vsyncpa [#allocation4], 1
    %s325 = scalar_lea.sflag [#allocation4], 1
    %326 = vsyncpa %s325, 1
    %327 = vsyncpa [#allocation5], 1
    %s328 = scalar_lea.sflag [#allocation5], 1
    %329 = vsyncpa %s328, 1

</llo_original>
